<compile_context>
chip_gen: v6e
topology: v6e:2x2x1
jax: 0.10.0
libtpu: 0.0.40
codegen_flags: <defaults>
</compile_context>

<pallas_src>
import math

import jax
import jax.numpy as jnp
from jax.experimental import pallas as pl
from jax.experimental.pallas import tpu as pltpu


def _pe_add_kernel(x_ref, ypos_ref, xpos_ref, cy_ref, cx_ref, ph_ref,
                   o_ref, pe_ref):
    """o = x + pe for one (cblk, hw_blk) slab of one batch element.

    x_ref    : VMEM (cblk, hw_blk)  input slab
    ypos_ref : VMEM (1, hw_blk)     y_position = (row+1)*max_h/H, flattened
    xpos_ref : VMEM (1, hw_blk)     x_position = (col+1)*max_w/W, flattened
    cy_ref   : VMEM (cblk, 1)       per-channel y coefficient (div_term or 0)
    cx_ref   : VMEM (cblk, 1)       per-channel x coefficient (div_term or 0)
    ph_ref   : VMEM (cblk, 1)       per-channel phase (0 -> sin, pi/2 -> cos)
    o_ref    : VMEM (cblk, hw_blk)  output slab
    pe_ref   : VMEM (cblk, hw_blk)  f32 scratch: PE cached across the batch axis
    """
    # PE depends only on the (channel, spatial) block, not on batch.  Recompute
    # it only for the first batch element of this block; later batch steps just
    # reuse the cached scratch (pure mem-bound add).
    @pl.when(pl.program_id(2) == 0)
    def _():
        arg = (ypos_ref[...] * cy_ref[...]
               + xpos_ref[...] * cx_ref[...]
               + ph_ref[...])                 # (cblk, hw_blk) via broadcast
        pe_ref[...] = jnp.sin(arg)            # single EUP op; cos via +pi/2

    o_ref[...] = (x_ref[...].astype(jnp.float32) + pe_ref[...]).astype(o_ref.dtype)


def _choose_tiles(C, HW, itemsize, target_bytes):
    """Pick (cblk, hw_blk).

    cblk divides C and is a multiple of 8 (or the full C) so the sublane dim of
    the block satisfies the (8,128) rule.  hw_blk is the full HW when a minimal
    channel block fits the slab target; otherwise HW is tiled with a
    multiple-of-128 block (trailing partial block is masked by Pallas).
    """
    divisors = [d for d in range(1, C + 1) if C % d == 0]
    valid = sorted(d for d in divisors if d == C or d % 8 == 0)
    cmin = valid[0]
    if cmin * HW * itemsize <= target_bytes:
        cblk = max(d for d in valid if d * HW * itemsize <= target_bytes)
        return cblk, HW
    hw_blk = (target_bytes // (cmin * itemsize)) // 128 * 128
    hw_blk = max(128, hw_blk)
    hw_blk = min(hw_blk, pl.cdiv(HW, 128) * 128)
    return cmin, hw_blk


def position_encoding_sine_norm(x, d_model, max_shape=(256, 256), *,
                                target_block_bytes=2 << 20):
    """x: [N, C, H, W] with C == d_model (d_model % 4 == 0). Returns x + pe."""
    N, C, H, W = x.shape
    assert C == d_model, "channel dim must equal d_model"
    assert d_model % 4 == 0, "d_model must be divisible by 4"

    HW = H * W
    itemsize = jnp.dtype(x.dtype).itemsize
    cblk, hw_blk = _choose_tiles(C, HW, itemsize, target_block_bytes)
    num_cblk = C // cblk
    num_hw = pl.cdiv(HW, hw_blk)

    # ---- host-side (plain JAX) constant setup -----------------------------
    # div_term = exp(arange(0, d_model//2, 2) * (-ln(10000) / (d_model//2)))
    div_term = jnp.exp(
        jnp.arange(0, d_model // 2, 2, dtype=jnp.float32)
        * (-math.log(10000.0) / (d_model // 2))
    )
    ch = jnp.arange(C)
    mode = ch % 4                      # 0: sin(x), 1: cos(x), 2: sin(y), 3: cos(y)
    div_c = div_term[ch // 4]          # per-channel frequency
    zero = jnp.zeros((), jnp.float32)
    cy = jnp.where(mode >= 2, div_c, zero)[:, None].astype(jnp.float32)   # (C,1)
    cx = jnp.where(mode < 2, div_c, zero)[:, None].astype(jnp.float32)    # (C,1)
    ph = jnp.where(mode % 2 == 1, jnp.float32(math.pi / 2.0), zero)[:, None]

    # Flattened (lane-dense) position maps, exactly as in the PyTorch impl:
    #   y_position = cumsum(ones, 0) * max_h / H  -> (row + 1) * max_h / H
    #   x_position = cumsum(ones, 1) * max_w / W  -> (col + 1) * max_w / W
    pix = jnp.arange(HW, dtype=jnp.int32)
    y_pos = ((pix // W).astype(jnp.float32) + 1.0) * (max_shape[0] / H)
    x_pos = ((pix % W).astype(jnp.float32) + 1.0) * (max_shape[1] / W)
    y_pos = y_pos[None, :]             # (1, HW)
    x_pos = x_pos[None, :]             # (1, HW)

    x_flat = x.reshape(N, C, HW)       # free: NCHW is contiguous

    cost = pl.CostEstimate(
        flops=N * C * HW + 5 * C * HW,           # add per elem + PE build once
        transcendentals=C * HW,                  # one sin per PE element
        bytes_accessed=2 * N * C * HW * itemsize + C * HW * 4,
    )

    out_flat = pl.pallas_call(
        _pe_add_kernel,
        out_shape=jax.ShapeDtypeStruct((N, C, HW), x.dtype),
        grid_spec=pltpu.PrefetchScalarGridSpec(
            num_scalar_prefetch=0,
            grid=(num_cblk, num_hw, N),  # channel/space outer, batch innermost
            in_specs=[
                pl.BlockSpec((None, cblk, hw_blk), lambda c, h, n: (n, c, h)),  # x
                pl.BlockSpec((1, hw_blk), lambda c, h, n: (0, h)),              # y_pos
                pl.BlockSpec((1, hw_blk), lambda c, h, n: (0, h)),              # x_pos
                pl.BlockSpec((cblk, 1), lambda c, h, n: (c, 0)),                # cy
                pl.BlockSpec((cblk, 1), lambda c, h, n: (c, 0)),                # cx
                pl.BlockSpec((cblk, 1), lambda c, h, n: (c, 0)),                # phase
            ],
            out_specs=pl.BlockSpec((None, cblk, hw_blk), lambda c, h, n: (n, c, h)),
            scratch_shapes=[pltpu.VMEM((cblk, hw_blk), jnp.float32)],           # PE cache
        ),
        compiler_params=pltpu.CompilerParams(
            # channel/space blocks are independent -> shard across TCs on v7x;
            # batch must stay sequential (PE scratch reuse).
            dimension_semantics=("parallel", "parallel", "arbitrary"),
        ),
        cost_estimate=cost,
    )(x_flat, y_pos, x_pos, cy, cx, ph)

    return out_flat.reshape(N, C, H, W)


def _reference(x, d_model, max_shape=(256, 256)):
    """Pure-JAX port of the PyTorch forward, for validation."""
    N, C, H, W = x.shape
    y_pos = jnp.cumsum(jnp.ones((H, W), jnp.float32), axis=0)[None] * max_shape[0] / H
    x_pos = jnp.cumsum(jnp.ones((H, W), jnp.float32), axis=1)[None] * max_shape[1] / W
    div = jnp.exp(
        jnp.arange(0, d_model // 2, 2, dtype=jnp.float32)
        * (-math.log(10000.0) / (d_model // 2))
    )[:, None, None]
    pe = jnp.zeros((d_model, H, W), jnp.float32)
    pe = pe.at[0::4].set(jnp.sin(x_pos * div))
    pe = pe.at[1::4].set(jnp.cos(x_pos * div))
    pe = pe.at[2::4].set(jnp.sin(y_pos * div))
    pe = pe.at[3::4].set(jnp.cos(y_pos * div))
    return x.astype(jnp.float32) + pe[None]


if __name__ == "__main__":
    key = jax.random.PRNGKey(0)
    k1, k2, k3, k4 = jax.random.split(key, 4)

    # Test 1: small LoFTR-like shape (HW is a multiple of 128 -> lane dense).
    d_model, N, H, W = 8, 2, 16, 16
    x = jax.random.normal(k1, (N, d_model, H, W), dtype=jnp.float32)
    out = jax.block_until_ready(position_encoding_sine_norm(x, d_model))
    ref = _reference(x, d_model)
    assert out.shape == x.shape and out.dtype == x.dtype
    assert jnp.allclose(out, ref, atol=5e-4, rtol=5e-4), "mismatch vs reference (test 1)"

    # Test 2: odd spatial size and minimal channel count (masked-lane path).
    d_model2, N2, H2, W2 = 4, 1, 6, 10
    x2 = jax.random.normal(k2, (N2, d_model2, H2, W2), dtype=jnp.float32)
    out2 = jax.block_until_ready(position_encoding_sine_norm(x2, d_model2))
    ref2 = _reference(x2, d_model2)
    assert out2.shape == x2.shape and out2.dtype == x2.dtype
    assert jnp.allclose(out2, ref2, atol=5e-4, rtol=5e-4), "mismatch vs reference (test 2)"

    # Test 3: force the HW-tiling path (small slab target) with a spatial size
    # that is NOT a multiple of 128 -> partial trailing block is masked.
    d_model3, N3, H3, W3 = 8, 1, 10, 20
    x3 = jax.random.normal(k3, (N3, d_model3, H3, W3), dtype=jnp.float32)
    out3 = jax.block_until_ready(
        position_encoding_sine_norm(x3, d_model3, target_block_bytes=2048))
    ref3 = _reference(x3, d_model3)
    assert out3.shape == x3.shape and out3.dtype == x3.dtype
    assert jnp.allclose(out3, ref3, atol=5e-4, rtol=5e-4), "mismatch vs reference (test 3)"

    # Test 4: bf16 input (f32 accumulate inside kernel, cast back on store).
    d_model4, N4, H4, W4 = 16, 2, 8, 16
    x4 = jax.random.normal(k4, (N4, d_model4, H4, W4), dtype=jnp.bfloat16)
    out4 = jax.block_until_ready(position_encoding_sine_norm(x4, d_model4))
    ref4 = _reference(x4, d_model4)
    assert out4.shape == x4.shape and out4.dtype == x4.dtype
    assert jnp.allclose(out4.astype(jnp.float32), ref4, atol=5e-2, rtol=5e-2), \
        "mismatch vs reference (test 4)"

    print("KERNEL_OK")
</pallas_src>

<mosaic_0001>
module attributes {stable_mosaic.version = 11 : i64} {
  func.func @_pe_add_kernel(%arg0: i32, %arg1: i32, %arg2: i32, %arg3: memref<1x8x256xf32, #tpu.memory_space<vmem>>, %arg4: memref<1x256xf32, #tpu.memory_space<vmem>>, %arg5: memref<1x256xf32, #tpu.memory_space<vmem>>, %arg6: memref<8x1xf32, #tpu.memory_space<vmem>>, %arg7: memref<8x1xf32, #tpu.memory_space<vmem>>, %arg8: memref<8x1xf32, #tpu.memory_space<vmem>>, %arg9: memref<1x8x256xf32, #tpu.memory_space<vmem>>, %arg10: memref<8x256xf32, #tpu.memory_space<vmem>>) attributes {dimension_semantics = [#tpu.dimension_semantics<parallel>, #tpu.dimension_semantics<parallel>, #tpu.dimension_semantics<arbitrary>], iteration_bounds = array<i64: 1, 1, 2>, scalar_prefetch = 0 : i64, scratch_operands = 1 : i64, tpu.core_type = #tpu.core_type<tc>, window_params = [{transform_indices = @transform_0, window_bounds = array<i64: 1, 8, 256>}, {transform_indices = @transform_1, window_bounds = array<i64: 1, 256>}, {transform_indices = @transform_2, window_bounds = array<i64: 1, 256>}, {transform_indices = @transform_3, window_bounds = array<i64: 8, 1>}, {transform_indices = @transform_4, window_bounds = array<i64: 8, 1>}, {transform_indices = @transform_5, window_bounds = array<i64: 8, 1>}, {transform_indices = @transform_6, window_bounds = array<i64: 1, 8, 256>}]} {
    %c0_i32 = arith.constant 0 : i32
    %0 = arith.cmpi eq, %arg2, %c0_i32 : i32
    %1 = arith.extui %0 : i1 to i32
    %c0_i32_0 = arith.constant 0 : i32
    %2 = arith.cmpi ne, %1, %c0_i32_0 : i32
    scf.if %2 {
      %c0_8 = arith.constant 0 : index
      %c0_9 = arith.constant 0 : index
      %10 = vector.load %arg4[%c0_8, %c0_9] : memref<1x256xf32, #tpu.memory_space<vmem>>, vector<1x256xf32>
      %c0_10 = arith.constant 0 : index
      %c0_11 = arith.constant 0 : index
      %11 = vector.load %arg6[%c0_10, %c0_11] : memref<8x1xf32, #tpu.memory_space<vmem>>, vector<8x1xf32>
      %12 = vector.broadcast %10 : vector<1x256xf32> to vector<8x256xf32>
      %13 = vector.broadcast %11 : vector<8x1xf32> to vector<8x256xf32>
      %14 = arith.mulf %12, %13 : vector<8x256xf32>
      %c0_12 = arith.constant 0 : index
      %c0_13 = arith.constant 0 : index
      %15 = vector.load %arg5[%c0_12, %c0_13] : memref<1x256xf32, #tpu.memory_space<vmem>>, vector<1x256xf32>
      %c0_14 = arith.constant 0 : index
      %c0_15 = arith.constant 0 : index
      %16 = vector.load %arg7[%c0_14, %c0_15] : memref<8x1xf32, #tpu.memory_space<vmem>>, vector<8x1xf32>
      %17 = vector.broadcast %15 : vector<1x256xf32> to vector<8x256xf32>
      %18 = vector.broadcast %16 : vector<8x1xf32> to vector<8x256xf32>
      %19 = arith.mulf %17, %18 : vector<8x256xf32>
      %20 = arith.addf %14, %19 : vector<8x256xf32>
      %c0_16 = arith.constant 0 : index
      %c0_17 = arith.constant 0 : index
      %21 = vector.load %arg8[%c0_16, %c0_17] : memref<8x1xf32, #tpu.memory_space<vmem>>, vector<8x1xf32>
      %22 = vector.broadcast %21 : vector<8x1xf32> to vector<8x256xf32>
      %23 = arith.addf %20, %22 : vector<8x256xf32>
      %24 = math.sin %23 : vector<8x256xf32>
      %c0_18 = arith.constant 0 : index
      %c0_19 = arith.constant 0 : index
      %25 = vector.load %arg10[%c0_18, %c0_19] : memref<8x256xf32, #tpu.memory_space<vmem>>, vector<8x256xf32>
      tpu.vector_store %arg10[%c0_18, %c0_19], %24 {strides = array<i32>} : memref<8x256xf32, #tpu.memory_space<vmem>>, vector<8x256xf32>,
    } else {
    }
    %c0 = arith.constant 0 : index
    %c0_1 = arith.constant 0 : index
    %c0_2 = arith.constant 0 : index
    %3 = vector.load %arg3[%c0, %c0_1, %c0_2] : memref<1x8x256xf32, #tpu.memory_space<vmem>>, vector<1x8x256xf32>
    %4 = vector.shape_cast %3 : vector<1x8x256xf32> to vector<8x256xf32>
    %c0_3 = arith.constant 0 : index
    %c0_4 = arith.constant 0 : index
    %5 = vector.load %arg10[%c0_3, %c0_4] : memref<8x256xf32, #tpu.memory_space<vmem>>, vector<8x256xf32>
    %6 = arith.addf %4, %5 : vector<8x256xf32>
    %c0_5 = arith.constant 0 : index
    %c0_6 = arith.constant 0 : index
    %c0_7 = arith.constant 0 : index
    %7 = vector.load %arg9[%c0_5, %c0_6, %c0_7] : memref<1x8x256xf32, #tpu.memory_space<vmem>>, vector<1x8x256xf32>
    %8 = vector.shape_cast %7 : vector<1x8x256xf32> to vector<8x256xf32>
    %9 = vector.shape_cast %6 : vector<8x256xf32> to vector<1x8x256xf32>
    tpu.vector_store %arg9[%c0_5, %c0_6, %c0_7], %9 {strides = array<i32>} : memref<1x8x256xf32, #tpu.memory_space<vmem>>, vector<1x8x256xf32>,
    return
  }
  func.func @transform_0(%arg0: i32, %arg1: i32, %arg2: i32) -> (i32, i32, i32) {
    %c0_i32 = arith.constant 0 : i32
    return %arg2, %arg0, %arg1 : i32, i32, i32
  }
  func.func @transform_1(%arg0: i32, %arg1: i32, %arg2: i32) -> (i32, i32) {
    %c0_i32 = arith.constant 0 : i32
    %c0_i32_0 = arith.constant 0 : i32
    return %c0_i32, %arg1 : i32, i32
  }
  func.func @transform_2(%arg0: i32, %arg1: i32, %arg2: i32) -> (i32, i32) {
    %c0_i32 = arith.constant 0 : i32
    %c0_i32_0 = arith.constant 0 : i32
    return %c0_i32, %arg1 : i32, i32
  }
  func.func @transform_3(%arg0: i32, %arg1: i32, %arg2: i32) -> (i32, i32) {
    %c0_i32 = arith.constant 0 : i32
    %c0_i32_0 = arith.constant 0 : i32
    return %arg0, %c0_i32 : i32, i32
  }
  func.func @transform_4(%arg0: i32, %arg1: i32, %arg2: i32) -> (i32, i32) {
    %c0_i32 = arith.constant 0 : i32
    %c0_i32_0 = arith.constant 0 : i32
    return %arg0, %c0_i32 : i32, i32
  }
  func.func @transform_5(%arg0: i32, %arg1: i32, %arg2: i32) -> (i32, i32) {
    %c0_i32 = arith.constant 0 : i32
    %c0_i32_0 = arith.constant 0 : i32
    return %arg0, %c0_i32 : i32, i32
  }
  func.func @transform_6(%arg0: i32, %arg1: i32, %arg2: i32) -> (i32, i32, i32) {
    %c0_i32 = arith.constant 0 : i32
    return %arg2, %arg0, %arg1 : i32, i32, i32
  }
}

</mosaic_0001>

<llo_original>
// kernel: tpu_custom_call.1
$region0: #{tpu_custom_call.1}
  #allocation0 [shape = 'u32[]', space=smem, size = 0x4, offset = 0x4, fixed_abs, tag = 'smem constant byte address 0x4 - core index']
  #allocation1 [shape = 'u32[144,128]{1,0:T(1,128)}', space=vmem, size = 0x12000, scoped, tag = 'internal scratch']
  #allocation2 [shape = 'f32[8,256]{1,0:T(8,128)}', space=vmem, size = 0x2000, scoped, tag = 'scratch operand']
  %s0 = inlined_call_operand.hbm [shape: f32[2,8,256], index: 0, kind: input, shape index: {}]
  %s1 = inlined_call_operand.vmem [shape: f32[1,256], index: 1, kind: input, shape index: {}]
  %s2 = inlined_call_operand.vmem [shape: f32[1,256], index: 2, kind: input, shape index: {}]
  %s3 = inlined_call_operand.vmem [shape: f32[8,1], index: 3, kind: input, shape index: {}]
  %s4 = inlined_call_operand.vmem [shape: f32[8,1], index: 4, kind: input, shape index: {}]
  %s5 = inlined_call_operand.vmem [shape: f32[8,1], index: 5, kind: input, shape index: {}]
  %s6 = inlined_call_operand.hbm [shape: f32[2,8,256], index: 6, kind: output, shape index: {}]
  %s7 = sld [smem:[#allocation0]]
  $region65: #{tpu_custom_call.1} parent=0
    _
  %s9 = ssub.s32 1, %s7
  %s10 = scalar_select 0, %s9, %s7
  $region1: #{tpu_custom_call.1} parent=0
    #allocation3 [shape = 'u8[16384]{0}', space=vmem, size = 0x4000, scoped, tag = 'input window, operand 0']
    #allocation4 [shape = 's32[2]{0}', space=sflag, size = 0x8, scoped, tag = 'scoped memory for tpu_custom_call.1']
    #allocation5 [shape = 's32[2]{0}', space=sflag, size = 0x8, scoped, tag = 'scoped memory for tpu_custom_call.1']
    #allocation6 [shape = 'u8[16384]{0}', space=vmem, size = 0x4000, scoped, tag = 'output window, operand 0']
    %11 = vsyncpa [#allocation4], 0
    %s12 = scalar_lea.sflag [#allocation4], 1
    %13 = vsyncpa %s12, 0
    %14 = vsyncpa [#allocation5], 0
    %s15 = scalar_lea.sflag [#allocation5], 1
    %16 = vsyncpa %s15, 0
    loop: start=0, step=1, limit=4
    $region2: #{tpu_custom_call.1} parent=1 // loop_pre_header
      _
    $region3: #{tpu_custom_call.1} parent=1 // loop_header
      %s18 = sphi 0, %s22
      %p19 = scmp.ge.s32.totalorder %s18, 4
      %s25 = sphi 0, %s44
      %s26 = sphi 0, %s40
      %s27 = sphi 0, %s36
      %s28 = sphi 0, %s25
      %s29 = sphi 0, %s26
      %s30 = sphi 0, %s27
      %s31 = sphi 0, %s28
      %s32 = sphi 0, %s29
      %s33 = sphi 0, %s30
      %s51 = sphi 0, %s53
      %s54 = sphi 0, %s51
      %s55 = sphi 0, %s54
      %s71 = sphi 0, %s55
      %s77 = sphi 0, %s79
      %s80 = sphi 0, %s77
      %s81 = sphi 0, %s80
      %s97 = sphi 0, %s81
      %s103 = sphi 0, %s105
      %s106 = sphi 0, %s103
      %s107 = sphi 0, %s106
      %s123 = sphi 0, %s107
      %s129 = sphi 0, %s131
      %s132 = sphi 0, %s129
      %s133 = sphi 0, %s132
      %s149 = sphi 0, %s133
      %s155 = sphi 0, %s157
      %s158 = sphi 0, %s155
      %s159 = sphi 0, %s158
      %s175 = sphi 0, %s159
      %s181 = sphi 0, %s183
      %s184 = sphi 0, %s181
      %s185 = sphi 0, %s184
      %s201 = sphi 0, %s185
      %s211 = sphi 0, %s213
      %s214 = sphi 0, %s211
      %s215 = sphi 0, %s214
      %s231 = sphi 0, %s215
    $region4: #{tpu_custom_call.1} parent=1 // loop_header_branch
      %21 = sbr.rel (%p19) target = $region8
    $region5: #{tpu_custom_call.1} parent=1 // loop_body
      %s23 = ssub.s32 %s18, 1
      %s24 = ssub.s32 %s18, 2
      %s34 = sadd.s32 1, %s27
      %p35 = scmp.ge.s32.totalorder %s34, 2
      %s36 = scalar_select %p35, 0, %s34
      %s37 = sadd.s32 1, %s26
      %s38 = scalar_select %p35, %s37, %s26
      %p39 = scmp.ge.s32.totalorder %s38, 1
      %s40 = scalar_select %p39, 0, %s38
      %s41 = sadd.s32 1, %s25
      %s42 = scalar_select %p39, %s41, %s25
      %p43 = scmp.ge.s32.totalorder %s42, 1
      %s44 = scalar_select %p43, 0, %s42
      %s45 = ssub.s32 %s27, %s36
      %s46 = ssub.s32 %s25, %s44
      %s47 = sor.u32 %s45, %s46
      %s48 = ssub.s32 %s26, %s40
      %s49 = sor.u32 %s47, %s48
      %p50 = scmp.eq.s32.totalorder %s49, 0
      %s52 = sadd.s32 %s51, 1
      %s53 = scalar_select %p50, %s51, %s52
      %p56 = pneg %p50
      %p57 = scmp.eq.s32.totalorder %s18, 1
      %p58 = por %p56, %p57
      %p59 = scmp.ne.s32.totalorder %s51, %s54
      %p60 = scmp.eq.s32.totalorder %s18, 0
      %p61 = por %p59, %p60
      %p62 = scmp.ne.s32.totalorder %s51, %s54
      %p63 = scmp.eq.s32.totalorder %s23, 1
      %p64 = por %p62, %p63
      %p65 = scmp.ne.s32.totalorder %s54, %s55
      %p66 = scmp.eq.s32.totalorder %s23, 0
      %p67 = por %p65, %p66
      %p68 = scmp.ne.s32.totalorder %s54, %s55
      %p69 = scmp.eq.s32.totalorder %s24, 1
      %p70 = por %p68, %p69
      %p72 = scmp.ne.s32.totalorder %s55, %s71
      %p73 = scmp.eq.s32.totalorder %s24, 0
      %p74 = por %p72, %p73
      %s75 = ssub.s32 %s26, %s40
      %p76 = scmp.eq.s32.totalorder %s75, 0
      %s78 = sadd.s32 %s77, 1
      %s79 = scalar_select %p76, %s77, %s78
      %p82 = pneg %p76
      %p83 = scmp.eq.s32.totalorder %s18, 1
      %p84 = por %p82, %p83
      %p85 = scmp.ne.s32.totalorder %s77, %s80
      %p86 = scmp.eq.s32.totalorder %s18, 0
      %p87 = por %p85, %p86
      %p88 = scmp.ne.s32.totalorder %s77, %s80
      %p89 = scmp.eq.s32.totalorder %s23, 1
      %p90 = por %p88, %p89
      %p91 = scmp.ne.s32.totalorder %s80, %s81
      %p92 = scmp.eq.s32.totalorder %s23, 0
      %p93 = por %p91, %p92
      %p94 = scmp.ne.s32.totalorder %s80, %s81
      %p95 = scmp.eq.s32.totalorder %s24, 1
      %p96 = por %p94, %p95
      %p98 = scmp.ne.s32.totalorder %s81, %s97
      %p99 = scmp.eq.s32.totalorder %s24, 0
      %p100 = por %p98, %p99
      %s101 = ssub.s32 %s26, %s40
      %p102 = scmp.eq.s32.totalorder %s101, 0
      %s104 = sadd.s32 %s103, 1
      %s105 = scalar_select %p102, %s103, %s104
      %p108 = pneg %p102
      %p109 = scmp.eq.s32.totalorder %s18, 1
      %p110 = por %p108, %p109
      %p111 = scmp.ne.s32.totalorder %s103, %s106
      %p112 = scmp.eq.s32.totalorder %s18, 0
      %p113 = por %p111, %p112
      %p114 = scmp.ne.s32.totalorder %s103, %s106
      %p115 = scmp.eq.s32.totalorder %s23, 1
      %p116 = por %p114, %p115
      %p117 = scmp.ne.s32.totalorder %s106, %s107
      %p118 = scmp.eq.s32.totalorder %s23, 0
      %p119 = por %p117, %p118
      %p120 = scmp.ne.s32.totalorder %s106, %s107
      %p121 = scmp.eq.s32.totalorder %s24, 1
      %p122 = por %p120, %p121
      %p124 = scmp.ne.s32.totalorder %s107, %s123
      %p125 = scmp.eq.s32.totalorder %s24, 0
      %p126 = por %p124, %p125
      %s127 = ssub.s32 %s25, %s44
      %p128 = scmp.eq.s32.totalorder %s127, 0
      %s130 = sadd.s32 %s129, 1
      %s131 = scalar_select %p128, %s129, %s130
      %p134 = pneg %p128
      %p135 = scmp.eq.s32.totalorder %s18, 1
      %p136 = por %p134, %p135
      %p137 = scmp.ne.s32.totalorder %s129, %s132
      %p138 = scmp.eq.s32.totalorder %s18, 0
      %p139 = por %p137, %p138
      %p140 = scmp.ne.s32.totalorder %s129, %s132
      %p141 = scmp.eq.s32.totalorder %s23, 1
      %p142 = por %p140, %p141
      %p143 = scmp.ne.s32.totalorder %s132, %s133
      %p144 = scmp.eq.s32.totalorder %s23, 0
      %p145 = por %p143, %p144
      %p146 = scmp.ne.s32.totalorder %s132, %s133
      %p147 = scmp.eq.s32.totalorder %s24, 1
      %p148 = por %p146, %p147
      %p150 = scmp.ne.s32.totalorder %s133, %s149
      %p151 = scmp.eq.s32.totalorder %s24, 0
      %p152 = por %p150, %p151
      %s153 = ssub.s32 %s25, %s44
      %p154 = scmp.eq.s32.totalorder %s153, 0
      %s156 = sadd.s32 %s155, 1
      %s157 = scalar_select %p154, %s155, %s156
      %p160 = pneg %p154
      %p161 = scmp.eq.s32.totalorder %s18, 1
      %p162 = por %p160, %p161
      %p163 = scmp.ne.s32.totalorder %s155, %s158
      %p164 = scmp.eq.s32.totalorder %s18, 0
      %p165 = por %p163, %p164
      %p166 = scmp.ne.s32.totalorder %s155, %s158
      %p167 = scmp.eq.s32.totalorder %s23, 1
      %p168 = por %p166, %p167
      %p169 = scmp.ne.s32.totalorder %s158, %s159
      %p170 = scmp.eq.s32.totalorder %s23, 0
      %p171 = por %p169, %p170
      %p172 = scmp.ne.s32.totalorder %s158, %s159
      %p173 = scmp.eq.s32.totalorder %s24, 1
      %p174 = por %p172, %p173
      %p176 = scmp.ne.s32.totalorder %s159, %s175
      %p177 = scmp.eq.s32.totalorder %s24, 0
      %p178 = por %p176, %p177
      %s179 = ssub.s32 %s25, %s44
      %p180 = scmp.eq.s32.totalorder %s179, 0
      %s182 = sadd.s32 %s181, 1
      %s183 = scalar_select %p180, %s181, %s182
      %p186 = pneg %p180
      %p187 = scmp.eq.s32.totalorder %s18, 1
      %p188 = por %p186, %p187
      %p189 = scmp.ne.s32.totalorder %s181, %s184
      %p190 = scmp.eq.s32.totalorder %s18, 0
      %p191 = por %p189, %p190
      %p192 = scmp.ne.s32.totalorder %s181, %s184
      %p193 = scmp.eq.s32.totalorder %s23, 1
      %p194 = por %p192, %p193
      %p195 = scmp.ne.s32.totalorder %s184, %s185
      %p196 = scmp.eq.s32.totalorder %s23, 0
      %p197 = por %p195, %p196
      %p198 = scmp.ne.s32.totalorder %s184, %s185
      %p199 = scmp.eq.s32.totalorder %s24, 1
      %p200 = por %p198, %p199
      %p202 = scmp.ne.s32.totalorder %s185, %s201
      %p203 = scmp.eq.s32.totalorder %s24, 0
      %p204 = por %p202, %p203
      %s205 = ssub.s32 %s27, %s36
      %s206 = ssub.s32 %s25, %s44
      %s207 = sor.u32 %s205, %s206
      %s208 = ssub.s32 %s26, %s40
      %s209 = sor.u32 %s207, %s208
      %p210 = scmp.eq.s32.totalorder %s209, 0
      %s212 = sadd.s32 %s211, 1
      %s213 = scalar_select %p210, %s211, %s212
      %p216 = pneg %p210
      %p217 = scmp.eq.s32.totalorder %s18, 1
      %p218 = por %p216, %p217
      %p219 = scmp.ne.s32.totalorder %s211, %s214
      %p220 = scmp.eq.s32.totalorder %s18, 0
      %p221 = por %p219, %p220
      %p222 = scmp.ne.s32.totalorder %s211, %s214
      %p223 = scmp.eq.s32.totalorder %s23, 1
      %p224 = por %p222, %p223
      %p225 = scmp.ne.s32.totalorder %s214, %s215
      %p226 = scmp.eq.s32.totalorder %s23, 0
      %p227 = por %p225, %p226
      %p228 = scmp.ne.s32.totalorder %s214, %s215
      %p229 = scmp.eq.s32.totalorder %s24, 1
      %p230 = por %p228, %p229
      %p232 = scmp.ne.s32.totalorder %s215, %s231
      %p233 = scmp.eq.s32.totalorder %s24, 0
      %p234 = por %p232, %p233
      %p235 = scmp.le.s32.totalorder 1, %s18
      %p236 = scmp.lt.s32.totalorder %s18, 3
      %p237 = pnand %p235, %p236
      %p238 = pneg %p237
      // Predicated region
      $region9: #{tpu_custom_call.1} parent=5 // pred_check
        _
      $region10: #{tpu_custom_call.1} parent=5 // pred_check_branch
        %240 = sbr.rel (%p237) target = $region12
      $region11: #{tpu_custom_call.1} parent=5 // pred_region
        %s241 = ssub.s32 %s18, 1
        // Predicated region
        $region13: #{tpu_custom_call.1} parent=11 // pred_check
          %p242 = pneg %p93
        $region14: #{tpu_custom_call.1} parent=11 // pred_check_branch
          %244 = sbr.rel (%p242) target = $region16
        $region15: #{tpu_custom_call.1} parent=11 // pred_region
          %s245 = smul.u32 2, %s29
          %p246 = scmp.lt.s32.totalorder %s245, 1
          %s247 = scalar_select %p246, %s245, 1
          %s248 = scalar_lea.vmem %s1, %s247
          %s249 = smul.u32 2, %s29
        $region16: #{tpu_custom_call.1} parent=11 // pred_fallthru
          _
        // Predicated region
        $region17: #{tpu_custom_call.1} parent=11 // pred_check
          %p250 = pneg %p119
        $region18: #{tpu_custom_call.1} parent=11 // pred_check_branch
          %252 = sbr.rel (%p250) target = $region20
        $region19: #{tpu_custom_call.1} parent=11 // pred_region
          %s253 = smul.u32 2, %s29
          %p254 = scmp.lt.s32.totalorder %s253, 1
          %s255 = scalar_select %p254, %s253, 1
          %s256 = scalar_lea.vmem %s2, %s255
          %s257 = smul.u32 2, %s29
        $region20: #{tpu_custom_call.1} parent=11 // pred_fallthru
          _
        // Predicated region
        $region21: #{tpu_custom_call.1} parent=11 // pred_check
          %p258 = pneg %p145
        $region22: #{tpu_custom_call.1} parent=11 // pred_check_branch
          %260 = sbr.rel (%p258) target = $region24
        $region23: #{tpu_custom_call.1} parent=11 // pred_region
          %p261 = scmp.lt.s32.totalorder %s28, 0
          %s262 = scalar_select %p261, %s28, 0
          %s263 = smul.addr %s262, 8
          %s264 = scalar_lea.vmem %s3, %s263
        $region24: #{tpu_custom_call.1} parent=11 // pred_fallthru
          _
        // Predicated region
        $region25: #{tpu_custom_call.1} parent=11 // pred_check
          %p265 = pneg %p171
        $region26: #{tpu_custom_call.1} parent=11 // pred_check_branch
          %267 = sbr.rel (%p265) target = $region28
        $region27: #{tpu_custom_call.1} parent=11 // pred_region
          %p268 = scmp.lt.s32.totalorder %s28, 0
          %s269 = scalar_select %p268, %s28, 0
          %s270 = smul.addr %s269, 8
          %s271 = scalar_lea.vmem %s4, %s270
        $region28: #{tpu_custom_call.1} parent=11 // pred_fallthru
          _
        // Predicated region
        $region29: #{tpu_custom_call.1} parent=11 // pred_check
          %p272 = pneg %p197
        $region30: #{tpu_custom_call.1} parent=11 // pred_check_branch
          %274 = sbr.rel (%p272) target = $region32
        $region31: #{tpu_custom_call.1} parent=11 // pred_region
          %p275 = scmp.lt.s32.totalorder %s28, 0
          %s276 = scalar_select %p275, %s28, 0
          %s277 = smul.addr %s276, 8
          %s278 = scalar_lea.vmem %s5, %s277
        $region32: #{tpu_custom_call.1} parent=11 // pred_fallthru
          _
      $region12: #{tpu_custom_call.1} parent=5 // pred_fallthru
        _
      %p279 = scmp.lt.s32.totalorder %s18, 2
      // Predicated region
      $region33: #{tpu_custom_call.1} parent=5 // pred_check
        %p280 = pneg %p279
      $region34: #{tpu_custom_call.1} parent=5 // pred_check_branch
        %282 = sbr.rel (%p280) target = $region36
      $region35: #{tpu_custom_call.1} parent=5 // pred_region
        // Predicated region
        $region37: #{tpu_custom_call.1} parent=35 // pred_check
          %p283 = pneg %p61
        $region38: #{tpu_custom_call.1} parent=35 // pred_check_branch
          %285 = sbr.rel (%p283) target = $region40
        $region39: #{tpu_custom_call.1} parent=35 // pred_region
          %s286 = sand.u32 %s51, 1
          %s287 = scalar_lea.sflag [#allocation4], %s286
          %s288 = sand.u32 %s51, 1
          %s289 = smul.addr %s288, 16
          %s290 = scalar_lea.vmem [#allocation3], %s289
          %s291 = smul.u32 2, %s26
          %s293 = ssub.s32 256, 256
          %294 = vsyncadd %s287, %s293
          %s295 = smul.addr %s25, 2
          %s296 = sadd.s32 %s291, %s295
          %s297 = smul.addr %s27, 2
          %s298 = sadd.s32 %s296, %s297
          %s299 = smul.addr %s298, 128
          %s300 = scalar_lea.hbm %s0, %s299
          %s302 = sshll.u32 %s290, 4
          %s303 = int_to_ptr.vmem [resolvable:$true] %s302
          %305 = dma.hbm_to_vmem [thread:$0]  %s300, 256, %s303, %s287
        $region40: #{tpu_custom_call.1} parent=35 // pred_fallthru
          _
      $region36: #{tpu_custom_call.1} parent=5 // pred_fallthru
        _
      %p306 = scmp.le.s32.totalorder 1, %s18
      %p307 = scmp.lt.s32.totalorder %s18, 3
      %p308 = pnand %p306, %p307
      %p309 = pneg %p308
      // Predicated region
      $region41: #{tpu_custom_call.1} parent=5 // pred_check
        _
      $region42: #{tpu_custom_call.1} parent=5 // pred_check_branch
        %311 = sbr.rel (%p308) target = $region44
      $region43: #{tpu_custom_call.1} parent=5 // pred_region
        %s312 = ssub.s32 %s18, 1
        %s313 = sand.u32 %s54, 1
        %s314 = scalar_lea.sflag [#allocation4], %s313
        %s315 = sand.u32 %s54, 1
        %s316 = smul.addr %s315, 16
        %s317 = scalar_lea.vmem [#allocation3], %s316
        // Predicated region
        $region45: #{tpu_custom_call.1} parent=43 // pred_check
          %p318 = pneg %p67
        $region46: #{tpu_custom_call.1} parent=43 // pred_check_branch
          %320 = sbr.rel (%p318) target = $region48
        $region47: #{tpu_custom_call.1} parent=43 // pred_region
          %321 = dma.done %s314, 256
        $region48: #{tpu_custom_call.1} parent=43 // pred_fallthru
          _
        %s322 = sand.u32 %s54, 1
        %s323 = scalar_lea.sflag [#allocation4], %s322
        %s324 = sand.u32 %s54, 1
        %s325 = smul.addr %s324, 16
        %s326 = scalar_lea.vmem [#allocation3], %s325
        %p327 = pneg %p67
        %p328 = pneg %p64
        %s329 = smul.u32 2, %s29
        %p330 = scmp.lt.s32.totalorder %s329, 1
        %s331 = scalar_select %p330, %s329, 1
        %s332 = scalar_lea.vmem %s1, %s331
        %p333 = pneg %p93
        %p334 = pneg %p90
        %s335 = smul.u32 2, %s29
        %p336 = scmp.lt.s32.totalorder %s335, 1
        %s337 = scalar_select %p336, %s335, 1
        %s338 = scalar_lea.vmem %s2, %s337
        %p339 = pneg %p119
        %p340 = pneg %p116
        %p341 = scmp.lt.s32.totalorder %s28, 0
        %s342 = scalar_select %p341, %s28, 0
        %s343 = smul.addr %s342, 8
        %s344 = scalar_lea.vmem %s3, %s343
        %p345 = pneg %p145
        %p346 = pneg %p142
        %p347 = scmp.lt.s32.totalorder %s28, 0
        %s348 = scalar_select %p347, %s28, 0
        %s349 = smul.addr %s348, 8
        %s350 = scalar_lea.vmem %s4, %s349
        %p351 = pneg %p171
        %p352 = pneg %p168
        %p353 = scmp.lt.s32.totalorder %s28, 0
        %s354 = scalar_select %p353, %s28, 0
        %s355 = smul.addr %s354, 8
        %s356 = scalar_lea.vmem %s5, %s355
        %p357 = pneg %p197
        %p358 = pneg %p194
        %p359 = pneg %p227
        %p360 = pneg %p224
        %s361 = sand.u32 %s214, 1
        %s362 = scalar_lea.sflag [#allocation5], %s361
        %s363 = sand.u32 %s214, 1
        %s364 = smul.addr %s363, 16
        %s365 = scalar_lea.vmem [#allocation6], %s364
        %s366 = smul.u32 2, %s29
        %s367 = smul.u32 2, %s29
        %p368 = scmp.lt.s32.totalorder %s367, 1
        %s369 = scalar_select %p368, %s367, 1
        %s370 = scalar_lea.vmem %s1, %s369
        %s371 = smul.u32 2, %s29
        %s372 = smul.u32 2, %s29
        %p373 = scmp.lt.s32.totalorder %s372, 1
        %s374 = scalar_select %p373, %s372, 1
        %s375 = scalar_lea.vmem %s2, %s374
        %s376 = smul.u32 2, %s29
        %p377 = scmp.lt.s32.totalorder %s28, 0
        %s378 = scalar_select %p377, %s28, 0
        %s379 = smul.addr %s378, 8
        %s380 = scalar_lea.vmem %s3, %s379
        %p381 = scmp.lt.s32.totalorder %s28, 0
        %s382 = scalar_select %p381, %s28, 0
        %s383 = smul.addr %s382, 8
        %s384 = scalar_lea.vmem %s4, %s383
        %p385 = scmp.lt.s32.totalorder %s28, 0
        %s386 = scalar_select %p385, %s28, 0
        %s387 = smul.addr %s386, 8
        %s388 = scalar_lea.vmem %s5, %s387
        %s389 = smul.u32 2, %s29
        %p390 = scmp.eq.s32.totalorder %s30, 0
        // Predicated region
        $region49: #{tpu_custom_call.1} parent=43 // pred_check
          %p391 = pneg %p390
        $region50: #{tpu_custom_call.1} parent=43 // pred_check_branch
          %393 = sbr.rel (%p391) target = $region52
        $region51: #{tpu_custom_call.1} parent=43 // pred_region
          %v394 = vld [vmem:[%s370] sm:$0x3]
          %v395 = vld [vmem:[%s380] sm:$0xff]
          %v397 = vlaneseq
          %v398 = vshrl.u32 %v397, 7
          %v399 = vsub.s32 0, %v398
          %v400 = vrot.slane %v394, %v399
          %v401 = vlaneseq
          %v402 = vshrl.u32 %v401, 7
          %v403 = vsub.s32 1, %v402
          %v404 = vrot.slane %v394, %v403
          %408 = vset.pattern.permute.xlu0 0
          %409 = vperm.xlu0 %408, %v395
          %v410 = vpop.permute.xlu0 %409
          %v412 = vmul.f32 %v400, %v410
          %v413 = vmul.f32 %v404, %v410
          %v414 = vld [vmem:[%s375] sm:$0x3]
          %v415 = vld [vmem:[%s384] sm:$0xff]
          %v417 = vlaneseq
          %v418 = vshrl.u32 %v417, 7
          %v419 = vsub.s32 0, %v418
          %v420 = vrot.slane %v414, %v419
          %v421 = vlaneseq
          %v422 = vshrl.u32 %v421, 7
          %v423 = vsub.s32 1, %v422
          %v424 = vrot.slane %v414, %v423
          %428 = vset.pattern.permute.xlu0 0
          %429 = vperm.xlu0 %428, %v415
          %v430 = vpop.permute.xlu0 %429
          %v432 = vmul.f32 %v420, %v430
          %v433 = vmul.f32 %v424, %v430
          %v434 = vadd.f32 %v412, %v432
          %v435 = vadd.f32 %v413, %v433
          %v436 = vld [vmem:[%s388] sm:$0xff]
          %438 = vset.pattern.permute.xlu0 0
          %439 = vperm.xlu0 %438, %v436
          %v440 = vpop.permute.xlu0 %439
          %v442 = vadd.f32 %v434, %v440
          %v443 = vadd.f32 %v435, %v440
          %v444 = vand.u32 2147483647, %v442
          %vm445 = vcmp.le.f32.partialorder %v444, 0.7853982
          %vm446 = vcmp.lt.s32.totalorder %v442, 0
          %v447 = vand.u32 %v442, 2139095040
          %v448 = vshrl.u32 %v447, 23
          %v449 = vsub.s32 %v448, 127
          %v450 = vand.u32 2147483647, %v442
          %v451 = vand.u32 %v450, 8388607
          %v452 = vor.u32 %v451, 8388608
          %v453 = vsub.s32 0, %v452
          %v454 = vadd.s32 %v449, 1
          %vm455 = vcmp.gt.s32.totalorder %v454, 0
          %v456 = vsel %vm455, %v454, 0
          %v457 = vshrl.u32 %v456, 5
          %v458 = vand.u32 %v456, 31
          %v459 = vsub.s32 32, %v458
          %v460 = vshrl.u32 683565275, %v459
          %v461 = vshll.u32 683565275, %v458
          %v462 = vshrl.u32 2475754826, %v459
          %v463 = vor.u32 %v461, %v462
          %v464 = vshll.u32 2475754826, %v458
          %v465 = vshrl.u32 2131351028, %v459
          %v466 = vor.u32 %v464, %v465
          %v467 = vshll.u32 2131351028, %v458
          %v468 = vshrl.u32 2102212464, %v459
          %v469 = vor.u32 %v467, %v468
          %v470 = vshll.u32 2102212464, %v458
          %v471 = vshrl.u32 920167782, %v459
          %v472 = vor.u32 %v470, %v471
          %v473 = vshll.u32 920167782, %v458
          %v474 = vshrl.u32 1326507024, %v459
          %v475 = vor.u32 %v473, %v474
          %vm476 = vcmp.lt.s32.totalorder %v457, 1
          %vm477 = vcmp.lt.s32.totalorder %v457, 2
          %vm478 = vcmp.lt.s32.totalorder %v457, 3
          %vm479 = vcmp.lt.s32.totalorder %v457, 4
          %v480 = vsel %vm476, %v460, %v463
          %v481 = vsel %vm479, %v469, 2102212464
          %v482 = vsel %vm478, %v466, %v481
          %v483 = vsel %vm477, %v480, %v482
          %v484 = vsel %vm476, %v463, %v466
          %v485 = vsel %vm479, %v472, 920167782
          %v486 = vsel %vm478, %v469, %v485
          %v487 = vsel %vm477, %v484, %v486
          %v488 = vsel %vm476, %v466, %v469
          %v489 = vsel %vm479, %v475, 1326507024
          %v490 = vsel %vm478, %v472, %v489
          %v491 = vsel %vm477, %v488, %v490
          %v492 = vshll.u32 %v452, 8
          %v493 = vmul.u32.u64.compose %v492, %v491
          %v494 = vextract.low.u32 %v493
          %v495 = vextract.high.u32 %v493
          %v496 = vmul.u32.u64.compose %v492, %v487
          %v497 = vextract.low.u32 %v496
          %v498 = vextract.high.u32 %v496
          %v499 = vmul.u32 %v492, %v483
          %v500 = vadd.s32 %v495, %v497
          %vm501 = vc.u32 %v495, %v497
          %v502 = vadd.s32 %v498, 1
          %v503 = vsel %vm501, %v502, %v498
          %v504 = vadd.s32 %v499, %v503
          %v505 = vadd.s32 %v504, 536870912
          %v506 = vshrl.u32 %v505, 30
          %v507 = vshll.u32 %v506, 30
          %v508 = vsub.s32 %v504, %v507
          %vm509 = vcmp.lt.s32.totalorder %v508, 0
          %v510 = vsub.s32 0, %v508
          %v511 = vsel %vm509, %v510, %v508
          %v512 = vclz %v511
          %v513 = vsub.s32 %v512, 2
          %vm514 = vcmp.gt.s32.totalorder 0, %v513
          %v515 = vsel %vm514, 0, %v513
          %v516 = vsub.s32 32, %v515
          %v517 = vshll.u32 %v508, %v515
          %v518 = vshrl.u32 %v500, %v516
          %v519 = vor.u32 %v517, %v518
          %v520 = vsub.s32 4294967266, %v515
          %v521 = vadd.s32 %v520, 127
          %v522 = vshll.u32 %v521, 23
          %v523 = vor.u32 4788187, %v522
          %v524 = vand.u32 2147483647, %v523
          %v526 = vcvt.s32.f32 %v519
          %v527 = vmul.f32 %v526, %v524
          %v528 = vxor.u32 %v527, 2147483648
          %v529 = vsel %vm446, %v528, %v527
          %v530 = vsub.s32 4, %v506
          %v531 = vsel %vm446, %v530, %v506
          %v532 = vsel %vm445, %v442, %v529
          %v533 = vsel %vm445, 0, %v531
          %v534 = vcosq.f32.pop %v532
          %v535 = vsinq.f32.pop %v532
          %vm536 = vweird.f32 %v442
          %v537 = vadd.s32 %v533, 3
          %v538 = vand.u32 %v537, 3
          %vm539 = vcmp.lt.s32.totalorder %v538, 2
          %vm540 = vcmp.eq.s32.totalorder %v538, 0
          %v541 = vxor.u32 %v535, 2147483648
          %v542 = vsel %vm540, %v534, %v541
          %vm543 = vcmp.eq.s32.totalorder %v538, 2
          %v544 = vxor.u32 %v534, 2147483648
          %v545 = vsel %vm543, %v544, %v535
          %v546 = vsel %vm539, %v542, %v545
          %v547 = vsel %vm536, nan, %v546
          %v548 = vand.u32 2147483647, %v443
          %vm549 = vcmp.le.f32.partialorder %v548, 0.7853982
          %vm550 = vcmp.lt.s32.totalorder %v443, 0
          %v551 = vand.u32 %v443, 2139095040
          %v552 = vshrl.u32 %v551, 23
          %v553 = vsub.s32 %v552, 127
          %v554 = vand.u32 2147483647, %v443
          %v555 = vand.u32 %v554, 8388607
          %v556 = vor.u32 %v555, 8388608
          %v557 = vsub.s32 0, %v556
          %v558 = vadd.s32 %v553, 1
          %vm559 = vcmp.gt.s32.totalorder %v558, 0
          %v560 = vsel %vm559, %v558, 0
          %v561 = vshrl.u32 %v560, 5
          %v562 = vand.u32 %v560, 31
          %v563 = vsub.s32 32, %v562
          %v564 = vshrl.u32 683565275, %v563
          %v565 = vshll.u32 683565275, %v562
          %v566 = vshrl.u32 2475754826, %v563
          %v567 = vor.u32 %v565, %v566
          %v568 = vshll.u32 2475754826, %v562
          %v569 = vshrl.u32 2131351028, %v563
          %v570 = vor.u32 %v568, %v569
          %v571 = vshll.u32 2131351028, %v562
          %v572 = vshrl.u32 2102212464, %v563
          %v573 = vor.u32 %v571, %v572
          %v574 = vshll.u32 2102212464, %v562
          %v575 = vshrl.u32 920167782, %v563
          %v576 = vor.u32 %v574, %v575
          %v577 = vshll.u32 920167782, %v562
          %v578 = vshrl.u32 1326507024, %v563
          %v579 = vor.u32 %v577, %v578
          %vm580 = vcmp.lt.s32.totalorder %v561, 1
          %vm581 = vcmp.lt.s32.totalorder %v561, 2
          %vm582 = vcmp.lt.s32.totalorder %v561, 3
          %vm583 = vcmp.lt.s32.totalorder %v561, 4
          %v584 = vsel %vm580, %v564, %v567
          %v585 = vsel %vm583, %v573, 2102212464
          %v586 = vsel %vm582, %v570, %v585
          %v587 = vsel %vm581, %v584, %v586
          %v588 = vsel %vm580, %v567, %v570
          %v589 = vsel %vm583, %v576, 920167782
          %v590 = vsel %vm582, %v573, %v589
          %v591 = vsel %vm581, %v588, %v590
          %v592 = vsel %vm580, %v570, %v573
          %v593 = vsel %vm583, %v579, 1326507024
          %v594 = vsel %vm582, %v576, %v593
          %v595 = vsel %vm581, %v592, %v594
          %v596 = vshll.u32 %v556, 8
          %v597 = vmul.u32.u64.compose %v596, %v595
          %v598 = vextract.low.u32 %v597
          %v599 = vextract.high.u32 %v597
          %v600 = vmul.u32.u64.compose %v596, %v591
          %v601 = vextract.low.u32 %v600
          %v602 = vextract.high.u32 %v600
          %v603 = vmul.u32 %v596, %v587
          %v604 = vadd.s32 %v599, %v601
          %vm605 = vc.u32 %v599, %v601
          %v606 = vadd.s32 %v602, 1
          %v607 = vsel %vm605, %v606, %v602
          %v608 = vadd.s32 %v603, %v607
          %v609 = vadd.s32 %v608, 536870912
          %v610 = vshrl.u32 %v609, 30
          %v611 = vshll.u32 %v610, 30
          %v612 = vsub.s32 %v608, %v611
          %vm613 = vcmp.lt.s32.totalorder %v612, 0
          %v614 = vsub.s32 0, %v612
          %v615 = vsel %vm613, %v614, %v612
          %v616 = vclz %v615
          %v617 = vsub.s32 %v616, 2
          %vm618 = vcmp.gt.s32.totalorder 0, %v617
          %v619 = vsel %vm618, 0, %v617
          %v620 = vsub.s32 32, %v619
          %v621 = vshll.u32 %v612, %v619
          %v622 = vshrl.u32 %v604, %v620
          %v623 = vor.u32 %v621, %v622
          %v624 = vsub.s32 4294967266, %v619
          %v625 = vadd.s32 %v624, 127
          %v626 = vshll.u32 %v625, 23
          %v627 = vor.u32 4788187, %v626
          %v628 = vand.u32 2147483647, %v627
          %v630 = vcvt.s32.f32 %v623
          %v631 = vmul.f32 %v630, %v628
          %v632 = vxor.u32 %v631, 2147483648
          %v633 = vsel %vm550, %v632, %v631
          %v634 = vsub.s32 4, %v610
          %v635 = vsel %vm550, %v634, %v610
          %v636 = vsel %vm549, %v443, %v633
          %v637 = vsel %vm549, 0, %v635
          %v638 = vcosq.f32.pop %v636
          %v639 = vsinq.f32.pop %v636
          %vm640 = vweird.f32 %v443
          %v641 = vadd.s32 %v637, 3
          %v642 = vand.u32 %v641, 3
          %vm643 = vcmp.lt.s32.totalorder %v642, 2
          %vm644 = vcmp.eq.s32.totalorder %v642, 0
          %v645 = vxor.u32 %v639, 2147483648
          %v646 = vsel %vm644, %v638, %v645
          %vm647 = vcmp.eq.s32.totalorder %v642, 2
          %v648 = vxor.u32 %v638, 2147483648
          %v649 = vsel %vm647, %v648, %v639
          %v650 = vsel %vm643, %v646, %v649
          %v651 = vsel %vm640, nan, %v650
          %652 = vst [vmem:[#allocation2] sm:$0xff] %v547
          %653 = vst [vmem:[#allocation2 + $0x8] sm:$0xff] %v651
        $region52: #{tpu_custom_call.1} parent=43 // pred_fallthru
          _
        %v654 = vld [vmem:[%s317] sm:$0xff]
        %v655 = vld [vmem:[%s317 + $0x8] sm:$0xff]
        %v656 = vld [vmem:[#allocation2] sm:$0xff]
        %v657 = vld [vmem:[#allocation2 + $0x8] sm:$0xff]
        %v658 = vadd.f32 %v654, %v656
        %v659 = vadd.f32 %v655, %v657
        %660 = vst [vmem:[%s365] sm:$0xff] %v658
        %661 = vst [vmem:[%s365 + $0x8] sm:$0xff] %v659
        %s662 = sand.u32 %s214, 1
        %s663 = scalar_lea.sflag [#allocation5], %s662
        %s664 = sand.u32 %s214, 1
        %s665 = smul.addr %s664, 16
        %s666 = scalar_lea.vmem [#allocation6], %s665
        // Predicated region
        $region53: #{tpu_custom_call.1} parent=43 // pred_check
          %p667 = pneg %p224
        $region54: #{tpu_custom_call.1} parent=43 // pred_check_branch
          %669 = sbr.rel (%p667) target = $region56
        $region55: #{tpu_custom_call.1} parent=43 // pred_region
          %s670 = smul.u32 2, %s29
          %s672 = ssub.s32 256, 256
          %673 = vsyncadd %s663, %s672
          %s674 = smul.addr %s28, 2
          %s675 = sadd.s32 %s670, %s674
          %s676 = smul.addr %s30, 2
          %s677 = sadd.s32 %s675, %s676
          %s678 = smul.addr %s677, 128
          %s679 = scalar_lea.hbm %s6, %s678
          %s681 = sshll.u32 %s666, 4
          %s682 = int_to_ptr.vmem [resolvable:$true] %s681
          %684 = dma.vmem_to_hbm [thread:$0]  %s682, 256, %s679, %s663
        $region56: #{tpu_custom_call.1} parent=43 // pred_fallthru
          _
      $region44: #{tpu_custom_call.1} parent=5 // pred_fallthru
        _
      %p685 = scmp.le.s32.totalorder 2, %s18
      // Predicated region
      $region57: #{tpu_custom_call.1} parent=5 // pred_check
        %p686 = pneg %p685
      $region58: #{tpu_custom_call.1} parent=5 // pred_check_branch
        %688 = sbr.rel (%p686) target = $region60
      $region59: #{tpu_custom_call.1} parent=5 // pred_region
        %s689 = ssub.s32 %s18, 2
        // Predicated region
        $region61: #{tpu_custom_call.1} parent=59 // pred_check
          %p690 = pneg %p230
        $region62: #{tpu_custom_call.1} parent=59 // pred_check_branch
          %692 = sbr.rel (%p690) target = $region64
        $region63: #{tpu_custom_call.1} parent=59 // pred_region
          %s693 = sand.u32 %s215, 1
          %s694 = scalar_lea.sflag [#allocation5], %s693
          %s695 = sand.u32 %s215, 1
          %s696 = smul.addr %s695, 16
          %s697 = scalar_lea.vmem [#allocation6], %s696
          %698 = dma.done %s694, 256
        $region64: #{tpu_custom_call.1} parent=59 // pred_fallthru
          _
      $region60: #{tpu_custom_call.1} parent=5 // pred_fallthru
        _
    $region6: #{tpu_custom_call.1} parent=1 // loop_footer
      %s22 = sadd.s32 1, %s18
    $region7: #{tpu_custom_call.1} parent=1 // loop_footer_branch
      %17 = sbr.rel target = $region3
    $region8: #{tpu_custom_call.1} parent=1 // loop_exit
      _
    %699 = vsyncpa [#allocation4], 1
    %s700 = scalar_lea.sflag [#allocation4], 1
    %701 = vsyncpa %s700, 1
    %702 = vsyncpa [#allocation5], 1
    %s703 = scalar_lea.sflag [#allocation5], 1
    %704 = vsyncpa %s703, 1

</llo_original>
